<compile_context>
chip_gen: v6e
topology: v6e:2x2x1
jax: 0.10.0
libtpu: 0.0.40
codegen_flags: <defaults>
</compile_context>

<pallas_src>
import jax
import jax.numpy as jnp
from jax.experimental import pallas as pl
from jax.experimental.pallas import tpu as pltpu


LANE_CANDIDATES = (1024, 512, 256, 128)   # lane-dense widths (multiples of 128)
TARGET_BLOCK_BYTES = 2 * 1024 * 1024      # ~2 MiB blocks: on the HBM-BW plateau,
                                          # 2 arrays x 2 buffers = 8 MiB VMEM


def _round_up(a: int, b: int) -> int:
    return -(-a // b) * b


def _round_down(a: int, b: int) -> int:
    return (a // b) * b


def _sublane(dtype) -> int:
    # Native sublane packing per dtype width; default to 8 for anything else
    # (8-byte dtypes are not expected on TPU).
    return {4: 8, 2: 16, 1: 32}.get(jnp.dtype(dtype).itemsize, 8)


def _pick_block_rows(rows: int, lane: int, itemsize: int, sub: int) -> int:
    """Byte-targeted block rows; ensures >=2 grid steps when there is enough work."""
    br = max(sub, _round_down(max(TARGET_BLOCK_BYTES // (lane * itemsize), 1), sub))
    if rows >= 2 * sub:
        # Let v7x's two TensorCores both get work on mid-size tensors.
        br = min(br, _round_up(-(-rows // 2), sub))
    if br >= rows:
        return rows  # single block spanning the whole (full-dim) row axis
    return br


def _scale_kernel(scale_ref, x_ref, o_ref):
    # scale_ref: (1,) f32 in SMEM; x_ref/o_ref: (block_rows, lane) VMEM tiles.
    # Cast scalar to x's dtype first (matches scale.type_as(x)), then multiply.
    o_ref[...] = x_ref[...] * scale_ref[0].astype(x_ref.dtype)


def scale_forward(x, scale):
    """Equivalent of _Scale(scale).forward(x) for any input shape/dtype."""
    orig_shape = x.shape
    dtype = x.dtype
    total = int(x.size)
    if total == 0:
        return x

    itemsize = jnp.dtype(dtype).itemsize
    sub = _sublane(dtype)

    # Choose a copy-free 2D view.  Prefer a lane-dense flat view (unmasked,
    # full-width vector stores); otherwise collapse to the natural 2D shape.
    lane = None
    for cand in LANE_CANDIDATES:
        if total % cand == 0:
            lane = cand
            break
    if lane is not None:
        x2 = x.reshape(total // lane, lane)
    else:
        # Ragged flat size: last dim of the view equals the full array dim, so
        # the BlockSpec is legal even when it is not a multiple of 128 (stores
        # on the last dim may be masked, but there are no extra HBM passes).
        # TODO(synk): a very large 1-D array with a size not divisible by 128
        # would make this a single oversized block; not a shape this VAE emits.
        if x.ndim >= 2:
            x2 = x.reshape(-1, orig_shape[-1])
        else:
            x2 = x.reshape(1, -1)
        lane = x2.shape[-1]

    rows = x2.shape[0]
    block_rows = _pick_block_rows(rows, lane, itemsize, sub)
    grid = (-(-rows // block_rows),)

    # Scalar lives in SMEM as f32; cast to x.dtype happens inside the kernel.
    scale_arr = jnp.asarray(scale, dtype=jnp.float32).reshape(1)

    out2 = pl.pallas_call(
        _scale_kernel,
        out_shape=jax.ShapeDtypeStruct(x2.shape, dtype),
        grid=grid,
        in_specs=[
            pl.BlockSpec(memory_space=pltpu.MemorySpace.SMEM),   # scalar, untiled
            pl.BlockSpec((block_rows, lane), lambda i: (i, 0)),  # lane-dense tile
        ],
        out_specs=pl.BlockSpec((block_rows, lane), lambda i: (i, 0)),
        compiler_params=pltpu.CompilerParams(
            dimension_semantics=("parallel",),
        ),
        cost_estimate=pl.CostEstimate(
            flops=total,
            transcendentals=0,
            bytes_accessed=2 * total * itemsize,
        ),
    )(scale_arr, x2)

    return out2.reshape(orig_shape)


if __name__ == "__main__":
    key = jax.random.PRNGKey(0)
    scale = 0.5  # module's __init__ takes a python scalar

    # Main case: f32, flat size divisible by 1024 -> lane-dense fast path.
    x = jax.random.normal(key, (2, 4, 16, 16), dtype=jnp.float32)
    y = jax.block_until_ready(scale_forward(x, scale))
    ref = x * jnp.asarray(scale, dtype=x.dtype)
    assert y.shape == x.shape and y.dtype == x.dtype
    assert jnp.allclose(y, ref, atol=1e-6, rtol=1e-6)

    # bf16: same fast path, byte-sized blocks.
    xb = jax.random.normal(key, (2, 4, 16, 16), dtype=jnp.bfloat16)
    yb = jax.block_until_ready(scale_forward(xb, scale))
    refb = xb * jnp.asarray(scale, dtype=xb.dtype)
    assert yb.shape == xb.shape and yb.dtype == xb.dtype
    assert jnp.allclose(yb.astype(jnp.float32), refb.astype(jnp.float32),
                        atol=1e-2, rtol=1e-2)

    # Ragged case: flat size (105) not divisible by 128 -> natural 2D view,
    # no pad / slice-back.
    xr = jax.random.normal(key, (3, 5, 7), dtype=jnp.float32)
    yr = jax.block_until_ready(scale_forward(xr, scale))
    refr = xr * jnp.asarray(scale, dtype=xr.dtype)
    assert yr.shape == xr.shape and yr.dtype == xr.dtype
    assert jnp.allclose(yr, refr, atol=1e-6, rtol=1e-6)

    print("KERNEL_OK")
</pallas_src>

<mosaic_0001>
module attributes {stable_mosaic.version = 11 : i64} {
  func.func @_scale_kernel(%arg0: i32, %arg1: memref<1xf32, #tpu.memory_space<smem>>, %arg2: memref<2x1024xf32, #tpu.memory_space<vmem>>, %arg3: memref<2x1024xf32, #tpu.memory_space<vmem>>) attributes {dimension_semantics = [#tpu.dimension_semantics<parallel>], iteration_bounds = array<i64: 1>, scalar_prefetch = 0 : i64, scratch_operands = 0 : i64, tpu.core_type = #tpu.core_type<tc>, window_params = [{transform_indices = @transform_0, window_bounds = array<i64: 1>}, {transform_indices = @transform_1, window_bounds = array<i64: 2, 1024>}, {transform_indices = @transform_2, window_bounds = array<i64: 2, 1024>}]} {
    %c0 = arith.constant 0 : index
    %c0_0 = arith.constant 0 : index
    %0 = vector.load %arg2[%c0, %c0_0] : memref<2x1024xf32, #tpu.memory_space<vmem>>, vector<2x1024xf32>
    %c0_1 = arith.constant 0 : index
    %1 = memref.load %arg1[%c0_1] : memref<1xf32, #tpu.memory_space<smem>>
    %2 = vector.broadcast %1 : f32 to vector<2x1024xf32>
    %3 = arith.mulf %0, %2 : vector<2x1024xf32>
    %c0_2 = arith.constant 0 : index
    %c0_3 = arith.constant 0 : index
    %4 = vector.load %arg3[%c0_2, %c0_3] : memref<2x1024xf32, #tpu.memory_space<vmem>>, vector<2x1024xf32>
    tpu.vector_store %arg3[%c0_2, %c0_3], %3 {strides = array<i32>} : memref<2x1024xf32, #tpu.memory_space<vmem>>, vector<2x1024xf32>,
    return
  }
  func.func @transform_0(%arg0: i32) -> i32 {
    %c0_i32 = arith.constant 0 : i32
    %c0_i32_0 = arith.constant 0 : i32
    return %c0_i32 : i32
  }
  func.func @transform_1(%arg0: i32) -> (i32, i32) {
    %c0_i32 = arith.constant 0 : i32
    %c0_i32_0 = arith.constant 0 : i32
    return %arg0, %c0_i32 : i32, i32
  }
  func.func @transform_2(%arg0: i32) -> (i32, i32) {
    %c0_i32 = arith.constant 0 : i32
    %c0_i32_0 = arith.constant 0 : i32
    return %arg0, %c0_i32 : i32, i32
  }
}

</mosaic_0001>

<llo_original>
// kernel: tpu_custom_call.1
$region0: #{tpu_custom_call.1}
  #allocation0 [shape = 'u32[]', space=smem, size = 0x4, offset = 0x4, fixed_abs, tag = 'smem constant byte address 0x4 - core index']
  #allocation1 [shape = 'u32[144,128]{1,0:T(1,128)}', space=vmem, size = 0x12000, scoped, tag = 'internal scratch']
  #allocation2 [shape = 'f32[1]{0:T(128)S(6)}', space=smem, size = 0x200, scoped, tag = 'scoped memory for tpu_custom_call.1']
  %s0 = inlined_call_operand.<no memory space> [shape: f32[1], index: 0, kind: input, shape index: {}]
  %s1 = inlined_call_operand.hbm [shape: f32[2,1024], index: 1, kind: input, shape index: {}]
  %s2 = inlined_call_operand.hbm [shape: f32[2,1024], index: 2, kind: output, shape index: {}]
  %s3 = sld [smem:[#allocation0]]
  $region22: #{tpu_custom_call.1} parent=0
    _
  %s5 = ssub.s32 1, %s3
  %s6 = scalar_select 0, %s5, %s3
  %7 = sst [smem:[#allocation2]] %s0
  $region1: #{tpu_custom_call.1} parent=0
    #allocation3 [shape = 'u8[8192]{0}', space=vmem, size = 0x2000, scoped, tag = 'input window, operand 1, single buffered']
    #allocation4 [shape = 's32[1]{0}', space=sflag, size = 0x4, scoped, tag = 'scoped memory for tpu_custom_call.1']
    #allocation5 [shape = 's32[1]{0}', space=sflag, size = 0x4, scoped, tag = 'scoped memory for tpu_custom_call.1']
    #allocation6 [shape = 'u8[8192]{0}', space=vmem, size = 0x2000, scoped, tag = 'output window, operand 0, single buffered']
    %8 = vsyncpa [#allocation4], 0
    %9 = vsyncpa [#allocation5], 0
    // Predicated region
    $region2: #{tpu_custom_call.1} parent=1 // pred_check
      _
    $region3: #{tpu_custom_call.1} parent=1 // pred_check_branch
      %11 = sbr.rel (0) target = $region5
    $region4: #{tpu_custom_call.1} parent=1 // pred_region
      _
    $region5: #{tpu_custom_call.1} parent=1 // pred_fallthru
      _
    // Predicated region
    $region6: #{tpu_custom_call.1} parent=1 // pred_check
      _
    $region7: #{tpu_custom_call.1} parent=1 // pred_check_branch
      %13 = sbr.rel (0) target = $region9
    $region8: #{tpu_custom_call.1} parent=1 // pred_region
      %s15 = ssub.s32 256, 256
      %16 = vsyncadd [#allocation4], %s15
      %s18 = sshll.u32 [#allocation3], 4
      %s19 = int_to_ptr.vmem [resolvable:$true] %s18
      %21 = dma.hbm_to_vmem [thread:$0]  %s1, 256, %s19, [#allocation4]
    $region9: #{tpu_custom_call.1} parent=1 // pred_fallthru
      _
    // Predicated region
    $region10: #{tpu_custom_call.1} parent=1 // pred_check
      _
    $region11: #{tpu_custom_call.1} parent=1 // pred_check_branch
      %23 = sbr.rel (0) target = $region13
    $region12: #{tpu_custom_call.1} parent=1 // pred_region
      %24 = dma.done [#allocation4], 256
    $region13: #{tpu_custom_call.1} parent=1 // pred_fallthru
      _
    %v25 = vld [vmem:[#allocation3] sm:$0xff]
    %v26 = vld [vmem:[#allocation3 + $0x8] sm:$0xff]
    %s27 = sld [smem:[#allocation2]]
    %v28 = vstv %s27
    %v29 = vmul.f32 %v25, %v28
    %v30 = vmul.f32 %v26, %v28
    %31 = vst [vmem:[#allocation6] sm:$0xff] %v29
    %32 = vst [vmem:[#allocation6 + $0x8] sm:$0xff] %v30
    // Predicated region
    $region14: #{tpu_custom_call.1} parent=1 // pred_check
      _
    $region15: #{tpu_custom_call.1} parent=1 // pred_check_branch
      %34 = sbr.rel (0) target = $region17
    $region16: #{tpu_custom_call.1} parent=1 // pred_region
      %s36 = ssub.s32 256, 256
      %37 = vsyncadd [#allocation5], %s36
      %s39 = sshll.u32 [#allocation6], 4
      %s40 = int_to_ptr.vmem [resolvable:$true] %s39
      %42 = dma.vmem_to_hbm [thread:$0]  %s40, 256, %s2, [#allocation5]
    $region17: #{tpu_custom_call.1} parent=1 // pred_fallthru
      _
    // Predicated region
    $region18: #{tpu_custom_call.1} parent=1 // pred_check
      _
    $region19: #{tpu_custom_call.1} parent=1 // pred_check_branch
      %44 = sbr.rel (0) target = $region21
    $region20: #{tpu_custom_call.1} parent=1 // pred_region
      %45 = dma.done [#allocation5], 256
    $region21: #{tpu_custom_call.1} parent=1 // pred_fallthru
      _
    %46 = vsyncpa [#allocation4], 1
    %47 = vsyncpa [#allocation5], 1

</llo_original>
